<compile_context>
chip_gen: v5e
topology: v5e:2x2
jax: 0.10.0
libtpu: 0.0.40
codegen_flags: <defaults>
</compile_context>

<pallas_src>
import functools

import jax
import jax.numpy as jnp
from jax.experimental import pallas as pl
from jax.experimental.pallas import tpu as pltpu

_LANE = 128
_VMEM_BUDGET_BYTES = 40 * 2**20   # conservative: fits v7x (64 MiB physical per TC)


def _round_up(x, m):
    return ((x + m - 1) // m) * m


def _cdiv(a, b):
    return -(-a // b)


def _pad2d(a, rows, cols):
    pr, pc = rows - a.shape[0], cols - a.shape[1]
    if pr == 0 and pc == 0:
        return a
    return jnp.pad(a, ((0, pr), (0, pc)))


# ----------------------------------------------------------------------------
# Dropout mask generation
# ----------------------------------------------------------------------------
def _hash_u32(x):
    """Wang/PCG-style 32-bit integer mix (portable fallback path only)."""
    x = x ^ (x >> jnp.uint32(16))
    x = x * jnp.uint32(0x7FEB352D)
    x = x ^ (x >> jnp.uint32(15))
    x = x * jnp.uint32(0x846CA68B)
    x = x ^ (x >> jnp.uint32(16))
    return x


def _hash_bits(shape, seed_u32, pid_u32, salt):
    # Scalar part of the key hoisted out of the per-element expression.
    base = (seed_u32 * jnp.uint32(0x27D4EB2F)
            + (pid_u32 + jnp.uint32(1)) * jnp.uint32(0xC2B2AE35)
            + jnp.uint32(salt) * jnp.uint32(0x165667B1))
    rows = jax.lax.broadcasted_iota(jnp.int32, shape, 0).astype(jnp.uint32)
    cols = jax.lax.broadcasted_iota(jnp.int32, shape, 1).astype(jnp.uint32)
    key = rows * jnp.uint32(0x9E3779B9) + cols * jnp.uint32(0x85EBCA6B) + base
    return _hash_u32(key)


def _dropout(h, p, use_hw_prng, seed_ref, pid, salt):
    """Inverted dropout: zero with probability p, scale survivors by 1/(1-p)."""
    if p >= 1.0:
        return jnp.zeros_like(h)
    if use_hw_prng:
        # Hardware PRNG: ~1 op per vreg, frees the VPU slot (biggest win on v5e).
        bits = pltpu.bitcast(pltpu.prng_random_bits(h.shape), jnp.uint32)
    else:
        # Portable counter-hash fallback (non-TPU backends / interpret mode).
        bits = _hash_bits(h.shape, seed_ref[0].astype(jnp.uint32),
                          pid.astype(jnp.uint32), salt)
    # 24-bit integer compare; keep probability == 1 - p (to within 2^-24).
    thr = jnp.uint32(int(p * (1 << 24)))
    keep = (bits >> jnp.uint32(8)) >= thr
    scale = jnp.float32(1.0 / (1.0 - p))
    return h * jnp.where(keep, scale, jnp.float32(0.0))


# ----------------------------------------------------------------------------
# Kernel
# ----------------------------------------------------------------------------
def varnet_kernel(seed_ref,
                  x_ref, w1_ref, b1_ref, w2_ref, b2_ref, w3_ref, b3_ref,
                  out_ref,
                  *, dropout1, dropout2, use_hw_prng):
    pid = pl.program_id(0)

    if use_hw_prng and (dropout1 > 0.0 or dropout2 > 0.0):
        pltpu.prng_seed(seed_ref[0], pid)      # independent stream per batch tile

    x = x_ref[...]                             # bf16 (tile_b, num_inputs)

    # ---- lin1 + ReLU (+ dropout1) ----
    h1 = jnp.dot(x, w1_ref[...], preferred_element_type=jnp.float32)
    h1 = jnp.maximum(h1 + b1_ref[...], 0.0)
    if dropout1 > 0.0:
        h1 = _dropout(h1, dropout1, use_hw_prng, seed_ref, pid, salt=1)
    h1 = h1.astype(x.dtype)                    # back to bf16 for the next MXU pass

    # ---- lin2 + ReLU (+ dropout2) ----
    h2 = jnp.dot(h1, w2_ref[...], preferred_element_type=jnp.float32)
    h2 = jnp.maximum(h2 + b2_ref[...], 0.0)
    if dropout2 > 0.0:
        h2 = _dropout(h2, dropout2, use_hw_prng, seed_ref, pid, salt=2)
    h2 = h2.astype(x.dtype)

    # ---- lin3 (no activation) ----
    out = jnp.dot(h2, w3_ref[...], preferred_element_type=jnp.float32) + b3_ref[...]
    out_ref[...] = out.astype(out_ref.dtype)

    # TODO(synk): record_var (self.variances bookkeeping) is Python-side stateful
    # logging, not part of the numerical forward output; it is omitted.


# ----------------------------------------------------------------------------
# Wrapper
# ----------------------------------------------------------------------------
def prepare_params(params, compute_dtype=jnp.bfloat16):
    """Pad hidden/output widths to multiples of 128 and cast weights to bf16.

    Call once, outside the per-step forward path, and reuse the result so the
    pad/cast HBM traffic is not paid on every call."""
    w1, b1, w2, b2, w3, b3 = params
    num_inputs, num_h1 = w1.shape
    num_h2 = w2.shape[1]
    num_out = w3.shape[1]
    h1p = _round_up(num_h1, _LANE)
    h2p = _round_up(num_h2, _LANE)
    outp = _round_up(num_out, _LANE)

    w1p = _pad2d(w1, num_inputs, h1p).astype(compute_dtype)
    b1p = _pad2d(b1.reshape(1, -1), 1, h1p).astype(jnp.float32)
    w2p = _pad2d(w2, h1p, h2p).astype(compute_dtype)
    b2p = _pad2d(b2.reshape(1, -1), 1, h2p).astype(jnp.float32)
    w3p = _pad2d(w3, h2p, outp).astype(compute_dtype)
    b3p = _pad2d(b3.reshape(1, -1), 1, outp).astype(jnp.float32)
    return (w1p, b1p, w2p, b2p, w3p, b3p), num_out


def varnet_forward(x, padded_params, num_outputs, *, dropout1, dropout2,
                   seed=0, training=True, out_dtype=jnp.float32):
    w1p, b1p, w2p, b2p, w3p, b3p = padded_params
    num_inputs = w1p.shape[0]
    h1p, h2p, outp = w1p.shape[1], w2p.shape[1], w3p.shape[1]
    compute_dtype = w1p.dtype

    if not training:                      # nn.Dropout is identity in eval mode
        dropout1, dropout2 = 0.0, 0.0
    dropout1 = float(dropout1)
    dropout2 = float(dropout2)

    # torch: X.reshape((-1, num_inputs)); single cast to the bf16 compute dtype.
    x2d = x.reshape(-1, num_inputs)
    if x2d.dtype != compute_dtype:
        x2d = x2d.astype(compute_dtype)
    batch = x2d.shape[0]

    in_bytes = jnp.dtype(compute_dtype).itemsize
    out_bytes = jnp.dtype(out_dtype).itemsize

    def footprint(tb):
        weights = (w1p.size + w2p.size + w3p.size) * in_bytes   # single-buffered residents
        biases = (b1p.size + b2p.size + b3p.size) * 4
        stream = 2 * tb * num_inputs * in_bytes + 2 * tb * outp * out_bytes
        temps = 2 * tb * (h1p + h2p) * 4                        # f32 h1/h2 + mask headroom
        return weights + biases + stream + temps

    # ---- batch tiling: no batch padding (ragged last tile is clipped by Pallas) ----
    if batch >= 16:
        # >= 2 grid tiles so both v7x TensorCores get work; cap at 1024 rows/tile.
        tile_b = min(1024, _round_up(_cdiv(batch, 2), 8))
        while tile_b > 8 and footprint(tile_b) > _VMEM_BUDGET_BYTES:
            tile_b = max(8, _round_up(tile_b // 2, 8))
        num_tiles = _cdiv(batch, tile_b)
    else:
        tile_b = batch                     # single full-dim block for tiny batches
        num_tiles = 1

    # Explicit VMEM limit (v5e's 16 MiB scoped default is too small for big tiles).
    vmem_limit = int(min(max(2 * footprint(tile_b), 32 * 2**20), 56 * 2**20))

    use_hw_prng = jax.default_backend() == "tpu"
    seed_arr = jnp.asarray([seed], dtype=jnp.int32)

    kernel = functools.partial(varnet_kernel,
                               dropout1=dropout1, dropout2=dropout2,
                               use_hw_prng=use_hw_prng)

    def build(single_buffer_weights):
        wmode = {"pipeline_mode": pl.Buffered(1)} if single_buffer_weights else {}
        grid_spec = pltpu.PrefetchScalarGridSpec(
            num_scalar_prefetch=1,
            grid=(num_tiles,),
            in_specs=[
                pl.BlockSpec((tile_b, num_inputs), lambda i, s: (i, 0)),  # streamed x
                pl.BlockSpec((num_inputs, h1p), lambda i, s: (0, 0), **wmode),
                pl.BlockSpec((1, h1p), lambda i, s: (0, 0), **wmode),
                pl.BlockSpec((h1p, h2p), lambda i, s: (0, 0), **wmode),
                pl.BlockSpec((1, h2p), lambda i, s: (0, 0), **wmode),
                pl.BlockSpec((h2p, outp), lambda i, s: (0, 0), **wmode),
                pl.BlockSpec((1, outp), lambda i, s: (0, 0), **wmode),
            ],
            out_specs=pl.BlockSpec((tile_b, outp), lambda i, s: (i, 0)),
        )
        return pl.pallas_call(
            kernel,
            out_shape=jax.ShapeDtypeStruct((batch, outp), out_dtype),
            grid_spec=grid_spec,
            compiler_params=pltpu.CompilerParams(
                dimension_semantics=("parallel",),
                vmem_limit_bytes=vmem_limit,
            ),
        )

    args = (seed_arr, x2d, w1p, b1p, w2p, b2p, w3p, b3p)
    try:
        out = build(True)(*args)
    except Exception:
        # Some JAX versions may reject Buffered(1); fall back to default buffering.
        out = build(False)(*args)

    return out if outp == num_outputs else out[:, :num_outputs]


def init_params(key, num_inputs, num_hiddens1, num_hiddens2, num_outputs):
    """Deterministic synthetic init (normal * 0.01 for weights, zeros for biases)."""
    k1, k2, k3 = jax.random.split(key, 3)
    w1 = jax.random.normal(k1, (num_inputs, num_hiddens1), jnp.float32) * 0.01
    b1 = jnp.zeros((1, num_hiddens1), jnp.float32)
    w2 = jax.random.normal(k2, (num_hiddens1, num_hiddens2), jnp.float32) * 0.01
    b2 = jnp.zeros((1, num_hiddens2), jnp.float32)
    w3 = jax.random.normal(k3, (num_hiddens2, num_outputs), jnp.float32) * 0.01
    b3 = jnp.zeros((1, num_outputs), jnp.float32)
    return (w1, b1, w2, b2, w3, b3)


if __name__ == "__main__":
    # Small shapes consistent with the module's forward (flatten -> 3-layer MLP).
    batch, channels, spatial = 2, 4, 8          # X: (2, 4, 8, 8) NCHW
    num_inputs = channels * spatial * spatial   # 256
    num_hiddens1, num_hiddens2, num_outputs = 64, 32, 16
    dropout1, dropout2 = 0.2, 0.5

    key = jax.random.PRNGKey(0)
    kx, kp = jax.random.split(key)
    x = jax.random.normal(kx, (batch, channels, spatial, spatial), jnp.float32)
    params = init_params(kp, num_inputs, num_hiddens1, num_hiddens2, num_outputs)

    padded_params, n_out = prepare_params(params)   # pad + bf16-cast once, reuse

    out = varnet_forward(x, padded_params, n_out,
                         dropout1=dropout1, dropout2=dropout2,
                         seed=0, training=True)
    out = jax.block_until_ready(out)
    assert out.shape == (batch, num_outputs)
    assert bool(jnp.all(jnp.isfinite(out)))
    print("KERNEL_OK")
</pallas_src>

<mosaic_0001>
module attributes {stable_mosaic.version = 11 : i64} {
  func.func @varnet_kernel(%arg0: i32, %arg1: memref<1xi32, #tpu.memory_space<smem>>, %arg2: memref<2x256xbf16, #tpu.memory_space<vmem>>, %arg3: memref<256x128xbf16, #tpu.memory_space<vmem>>, %arg4: memref<1x128xf32, #tpu.memory_space<vmem>>, %arg5: memref<128x128xbf16, #tpu.memory_space<vmem>>, %arg6: memref<1x128xf32, #tpu.memory_space<vmem>>, %arg7: memref<128x128xbf16, #tpu.memory_space<vmem>>, %arg8: memref<1x128xf32, #tpu.memory_space<vmem>>, %arg9: memref<2x128xf32, #tpu.memory_space<vmem>>) attributes {dimension_semantics = [#tpu.dimension_semantics<parallel>], iteration_bounds = array<i64: 1>, scalar_prefetch = 1 : i64, scratch_operands = 0 : i64, tpu.core_type = #tpu.core_type<tc>, window_params = [{transform_indices = @transform_0, window_bounds = array<i64: 2, 256>}, {pipeline_mode = #tpu.pipeline_mode<synchronous>, transform_indices = @transform_1, window_bounds = array<i64: 256, 128>}, {pipeline_mode = #tpu.pipeline_mode<synchronous>, transform_indices = @transform_2, window_bounds = array<i64: 1, 128>}, {pipeline_mode = #tpu.pipeline_mode<synchronous>, transform_indices = @transform_3, window_bounds = array<i64: 128, 128>}, {pipeline_mode = #tpu.pipeline_mode<synchronous>, transform_indices = @transform_4, window_bounds = array<i64: 1, 128>}, {pipeline_mode = #tpu.pipeline_mode<synchronous>, transform_indices = @transform_5, window_bounds = array<i64: 128, 128>}, {pipeline_mode = #tpu.pipeline_mode<synchronous>, transform_indices = @transform_6, window_bounds = array<i64: 1, 128>}, {transform_indices = @transform_7, window_bounds = array<i64: 2, 128>}]} {
    %c0 = arith.constant 0 : index
    %c0_0 = arith.constant 0 : index
    %0 = vector.load %arg2[%c0, %c0_0] : memref<2x256xbf16, #tpu.memory_space<vmem>>, vector<2x256xbf16>
    %c0_1 = arith.constant 0 : index
    %c0_2 = arith.constant 0 : index
    %1 = vector.load %arg3[%c0_1, %c0_2] : memref<256x128xbf16, #tpu.memory_space<vmem>>, vector<256x128xbf16>
    %cst = arith.constant dense<0.000000e+00> : vector<2x128xf32>
    %2 = tpu.matmul %0, %1, %cst {dimension_numbers = #tpu.dot_dimension_numbers<[1], [0], [0], [1], [0, 0, 1, 1], [], []>} : vector<2x256xbf16>, vector<256x128xbf16>, vector<2x128xf32> -> vector<2x128xf32>
    %c0_3 = arith.constant 0 : index
    %c0_4 = arith.constant 0 : index
    %3 = vector.load %arg4[%c0_3, %c0_4] : memref<1x128xf32, #tpu.memory_space<vmem>>, vector<1x128xf32>
    %4 = vector.broadcast %3 : vector<1x128xf32> to vector<2x128xf32>
    %5 = arith.addf %2, %4 : vector<2x128xf32>
    %cst_5 = arith.constant 0.000000e+00 : f32
    %6 = vector.broadcast %cst_5 : f32 to vector<2x128xf32>
    %7 = arith.maximumf %5, %6 : vector<2x128xf32>
    %c0_6 = arith.constant 0 : index
    %8 = memref.load %arg1[%c0_6] : memref<1xi32, #tpu.memory_space<smem>>
    %c668265263_i32 = arith.constant 668265263 : i32
    %9 = arith.muli %8, %c668265263_i32 : i32
    %c1_i32 = arith.constant 1 : i32
    %10 = arith.addi %arg0, %c1_i32 : i32
    %c-1028477387_i32 = arith.constant -1028477387 : i32
    %11 = arith.muli %10, %c-1028477387_i32 : i32
    %12 = arith.addi %9, %11 : i32
    %c1_i32_7 = arith.constant 1 : i32
    %c374761393_i32 = arith.constant 374761393 : i32
    %13 = arith.muli %c1_i32_7, %c374761393_i32 : i32
    %14 = arith.addi %12, %13 : i32
    %15 = tpu.iota {dimensions = array<i32: 0>} : vector<2x128xi32>
    %16 = tpu.iota {dimensions = array<i32: 1>} : vector<2x128xi32>
    %c-1640531527_i32 = arith.constant -1640531527 : i32
    %17 = vector.broadcast %c-1640531527_i32 : i32 to vector<2x128xi32>
    %18 = arith.muli %15, %17 : vector<2x128xi32>
    %c-2048144789_i32 = arith.constant -2048144789 : i32
    %19 = vector.broadcast %c-2048144789_i32 : i32 to vector<2x128xi32>
    %20 = arith.muli %16, %19 : vector<2x128xi32>
    %21 = arith.addi %18, %20 : vector<2x128xi32>
    %22 = vector.broadcast %14 : i32 to vector<2x128xi32>
    %23 = arith.addi %21, %22 : vector<2x128xi32>
    %c16_i32 = arith.constant 16 : i32
    %24 = vector.broadcast %c16_i32 : i32 to vector<2x128xi32>
    %25 = arith.shrui %23, %24 : vector<2x128xi32>
    %26 = arith.xori %23, %25 : vector<2x128xi32>
    %c2146121005_i32 = arith.constant 2146121005 : i32
    %27 = vector.broadcast %c2146121005_i32 : i32 to vector<2x128xi32>
    %28 = arith.muli %26, %27 : vector<2x128xi32>
    %c15_i32 = arith.constant 15 : i32
    %29 = vector.broadcast %c15_i32 : i32 to vector<2x128xi32>
    %30 = arith.shrui %28, %29 : vector<2x128xi32>
    %31 = arith.xori %28, %30 : vector<2x128xi32>
    %c-2073254261_i32 = arith.constant -2073254261 : i32
    %32 = vector.broadcast %c-2073254261_i32 : i32 to vector<2x128xi32>
    %33 = arith.muli %31, %32 : vector<2x128xi32>
    %c16_i32_8 = arith.constant 16 : i32
    %34 = vector.broadcast %c16_i32_8 : i32 to vector<2x128xi32>
    %35 = arith.shrui %33, %34 : vector<2x128xi32>
    %36 = arith.xori %33, %35 : vector<2x128xi32>
    %c8_i32 = arith.constant 8 : i32
    %37 = vector.broadcast %c8_i32 : i32 to vector<2x128xi32>
    %38 = arith.shrui %36, %37 : vector<2x128xi32>
    %c3355443_i32 = arith.constant 3355443 : i32
    %39 = vector.broadcast %c3355443_i32 : i32 to vector<2x128xi32>
    %40 = arith.cmpi uge, %38, %39 : vector<2x128xi32>
    %cst_9 = arith.constant 1.250000e+00 : f32
    %cst_10 = arith.constant 0.000000e+00 : f32
    %41 = vector.broadcast %cst_9 : f32 to vector<2x128xf32>
    %42 = vector.broadcast %cst_10 : f32 to vector<2x128xf32>
    %43 = arith.select %40, %41, %42 : vector<2x128xi1>, vector<2x128xf32>
    %44 = arith.mulf %7, %43 : vector<2x128xf32>
    %45 = arith.truncf %44 : vector<2x128xf32> to vector<2x128xbf16>
    %c0_11 = arith.constant 0 : index
    %c0_12 = arith.constant 0 : index
    %46 = vector.load %arg5[%c0_11, %c0_12] : memref<128x128xbf16, #tpu.memory_space<vmem>>, vector<128x128xbf16>
    %cst_13 = arith.constant dense<0.000000e+00> : vector<2x128xf32>
    %47 = tpu.matmul %45, %46, %cst_13 {dimension_numbers = #tpu.dot_dimension_numbers<[1], [0], [0], [1], [0, 0, 1, 1], [], []>} : vector<2x128xbf16>, vector<128x128xbf16>, vector<2x128xf32> -> vector<2x128xf32>
    %c0_14 = arith.constant 0 : index
    %c0_15 = arith.constant 0 : index
    %48 = vector.load %arg6[%c0_14, %c0_15] : memref<1x128xf32, #tpu.memory_space<vmem>>, vector<1x128xf32>
    %49 = vector.broadcast %48 : vector<1x128xf32> to vector<2x128xf32>
    %50 = arith.addf %47, %49 : vector<2x128xf32>
    %cst_16 = arith.constant 0.000000e+00 : f32
    %51 = vector.broadcast %cst_16 : f32 to vector<2x128xf32>
    %52 = arith.maximumf %50, %51 : vector<2x128xf32>
    %c0_17 = arith.constant 0 : index
    %53 = memref.load %arg1[%c0_17] : memref<1xi32, #tpu.memory_space<smem>>
    %c668265263_i32_18 = arith.constant 668265263 : i32
    %54 = arith.muli %53, %c668265263_i32_18 : i32
    %c1_i32_19 = arith.constant 1 : i32
    %55 = arith.addi %arg0, %c1_i32_19 : i32
    %c-1028477387_i32_20 = arith.constant -1028477387 : i32
    %56 = arith.muli %55, %c-1028477387_i32_20 : i32
    %57 = arith.addi %54, %56 : i32
    %c2_i32 = arith.constant 2 : i32
    %c374761393_i32_21 = arith.constant 374761393 : i32
    %58 = arith.muli %c2_i32, %c374761393_i32_21 : i32
    %59 = arith.addi %57, %58 : i32
    %60 = tpu.iota {dimensions = array<i32: 0>} : vector<2x128xi32>
    %61 = tpu.iota {dimensions = array<i32: 1>} : vector<2x128xi32>
    %c-1640531527_i32_22 = arith.constant -1640531527 : i32
    %62 = vector.broadcast %c-1640531527_i32_22 : i32 to vector<2x128xi32>
    %63 = arith.muli %60, %62 : vector<2x128xi32>
    %c-2048144789_i32_23 = arith.constant -2048144789 : i32
    %64 = vector.broadcast %c-2048144789_i32_23 : i32 to vector<2x128xi32>
    %65 = arith.muli %61, %64 : vector<2x128xi32>
    %66 = arith.addi %63, %65 : vector<2x128xi32>
    %67 = vector.broadcast %59 : i32 to vector<2x128xi32>
    %68 = arith.addi %66, %67 : vector<2x128xi32>
    %c16_i32_24 = arith.constant 16 : i32
    %69 = vector.broadcast %c16_i32_24 : i32 to vector<2x128xi32>
    %70 = arith.shrui %68, %69 : vector<2x128xi32>
    %71 = arith.xori %68, %70 : vector<2x128xi32>
    %c2146121005_i32_25 = arith.constant 2146121005 : i32
    %72 = vector.broadcast %c2146121005_i32_25 : i32 to vector<2x128xi32>
    %73 = arith.muli %71, %72 : vector<2x128xi32>
    %c15_i32_26 = arith.constant 15 : i32
    %74 = vector.broadcast %c15_i32_26 : i32 to vector<2x128xi32>
    %75 = arith.shrui %73, %74 : vector<2x128xi32>
    %76 = arith.xori %73, %75 : vector<2x128xi32>
    %c-2073254261_i32_27 = arith.constant -2073254261 : i32
    %77 = vector.broadcast %c-2073254261_i32_27 : i32 to vector<2x128xi32>
    %78 = arith.muli %76, %77 : vector<2x128xi32>
    %c16_i32_28 = arith.constant 16 : i32
    %79 = vector.broadcast %c16_i32_28 : i32 to vector<2x128xi32>
    %80 = arith.shrui %78, %79 : vector<2x128xi32>
    %81 = arith.xori %78, %80 : vector<2x128xi32>
    %c8_i32_29 = arith.constant 8 : i32
    %82 = vector.broadcast %c8_i32_29 : i32 to vector<2x128xi32>
    %83 = arith.shrui %81, %82 : vector<2x128xi32>
    %c8388608_i32 = arith.constant 8388608 : i32
    %84 = vector.broadcast %c8388608_i32 : i32 to vector<2x128xi32>
    %85 = arith.cmpi uge, %83, %84 : vector<2x128xi32>
    %cst_30 = arith.constant 2.000000e+00 : f32
    %cst_31 = arith.constant 0.000000e+00 : f32
    %86 = vector.broadcast %cst_30 : f32 to vector<2x128xf32>
    %87 = vector.broadcast %cst_31 : f32 to vector<2x128xf32>
    %88 = arith.select %85, %86, %87 : vector<2x128xi1>, vector<2x128xf32>
    %89 = arith.mulf %52, %88 : vector<2x128xf32>
    %90 = arith.truncf %89 : vector<2x128xf32> to vector<2x128xbf16>
    %c0_32 = arith.constant 0 : index
    %c0_33 = arith.constant 0 : index
    %91 = vector.load %arg7[%c0_32, %c0_33] : memref<128x128xbf16, #tpu.memory_space<vmem>>, vector<128x128xbf16>
    %cst_34 = arith.constant dense<0.000000e+00> : vector<2x128xf32>
    %92 = tpu.matmul %90, %91, %cst_34 {dimension_numbers = #tpu.dot_dimension_numbers<[1], [0], [0], [1], [0, 0, 1, 1], [], []>} : vector<2x128xbf16>, vector<128x128xbf16>, vector<2x128xf32> -> vector<2x128xf32>
    %c0_35 = arith.constant 0 : index
    %c0_36 = arith.constant 0 : index
    %93 = vector.load %arg8[%c0_35, %c0_36] : memref<1x128xf32, #tpu.memory_space<vmem>>, vector<1x128xf32>
    %94 = vector.broadcast %93 : vector<1x128xf32> to vector<2x128xf32>
    %95 = arith.addf %92, %94 : vector<2x128xf32>
    %c0_37 = arith.constant 0 : index
    %c0_38 = arith.constant 0 : index
    %96 = vector.load %arg9[%c0_37, %c0_38] : memref<2x128xf32, #tpu.memory_space<vmem>>, vector<2x128xf32>
    tpu.vector_store %arg9[%c0_37, %c0_38], %95 {strides = array<i32>} : memref<2x128xf32, #tpu.memory_space<vmem>>, vector<2x128xf32>,
    return
  }
  func.func @transform_0(%arg0: i32, %arg1: memref<1xi32, #tpu.memory_space<smem>>) -> (i32, i32) {
    %c0_i32 = arith.constant 0 : i32
    %c0_i32_0 = arith.constant 0 : i32
    return %arg0, %c0_i32 : i32, i32
  }
  func.func @transform_1(%arg0: i32, %arg1: memref<1xi32, #tpu.memory_space<smem>>) -> (i32, i32) {
    %c0_i32 = arith.constant 0 : i32
    %c0_i32_0 = arith.constant 0 : i32
    %c0_i32_1 = arith.constant 0 : i32
    return %c0_i32, %c0_i32_0 : i32, i32
  }
  func.func @transform_2(%arg0: i32, %arg1: memref<1xi32, #tpu.memory_space<smem>>) -> (i32, i32) {
    %c0_i32 = arith.constant 0 : i32
    %c0_i32_0 = arith.constant 0 : i32
    %c0_i32_1 = arith.constant 0 : i32
    return %c0_i32, %c0_i32_0 : i32, i32
  }
  func.func @transform_3(%arg0: i32, %arg1: memref<1xi32, #tpu.memory_space<smem>>) -> (i32, i32) {
    %c0_i32 = arith.constant 0 : i32
    %c0_i32_0 = arith.constant 0 : i32
    %c0_i32_1 = arith.constant 0 : i32
    return %c0_i32, %c0_i32_0 : i32, i32
  }
  func.func @transform_4(%arg0: i32, %arg1: memref<1xi32, #tpu.memory_space<smem>>) -> (i32, i32) {
    %c0_i32 = arith.constant 0 : i32
    %c0_i32_0 = arith.constant 0 : i32
    %c0_i32_1 = arith.constant 0 : i32
    return %c0_i32, %c0_i32_0 : i32, i32
  }
  func.func @transform_5(%arg0: i32, %arg1: memref<1xi32, #tpu.memory_space<smem>>) -> (i32, i32) {
    %c0_i32 = arith.constant 0 : i32
    %c0_i32_0 = arith.constant 0 : i32
    %c0_i32_1 = arith.constant 0 : i32
    return %c0_i32, %c0_i32_0 : i32, i32
  }
  func.func @transform_6(%arg0: i32, %arg1: memref<1xi32, #tpu.memory_space<smem>>) -> (i32, i32) {
    %c0_i32 = arith.constant 0 : i32
    %c0_i32_0 = arith.constant 0 : i32
    %c0_i32_1 = arith.constant 0 : i32
    return %c0_i32, %c0_i32_0 : i32, i32
  }
  func.func @transform_7(%arg0: i32, %arg1: memref<1xi32, #tpu.memory_space<smem>>) -> (i32, i32) {
    %c0_i32 = arith.constant 0 : i32
    %c0_i32_0 = arith.constant 0 : i32
    return %arg0, %c0_i32 : i32, i32
  }
}

module attributes {stable_mosaic.version = 11 : i64} {
  func.func @varnet_kernel(%arg0: i32, %arg1: memref<1xi32, #tpu.memory_space<smem>>, %arg2: memref<2x256xbf16, #tpu.memory_space<vmem>>, %arg3: memref<256x128xbf16, #tpu.memory_space<vmem>>, %arg4: memref<1x128xf32, #tpu.memory_space<vmem>>, %arg5: memref<128x128xbf16, #tpu.memory_space<vmem>>, %arg6: memref<1x128xf32, #tpu.memory_space<vmem>>, %arg7: memref<128x128xbf16, #tpu.memory_space<vmem>>, %arg8: memref<1x128xf32, #tpu.memory_space<vmem>>, %arg9: memref<2x128xf32, #tpu.memory_space<vmem>>) attributes {dimension_semantics = [#tpu.dimension_semantics<parallel>], iteration_bounds = array<i64: 1>, scalar_prefetch = 1 : i64, scratch_operands = 0 : i64, tpu.core_type = #tpu.core_type<tc>, window_params = [{transform_indices = @transform_0, window_bounds = array<i64: 2, 256>}, {pipeline_mode = #tpu.pipeline_mode<synchronous>, transform_indices = @transform_1, window_bounds = array<i64: 256, 128>}, {pipeline_mode = #tpu.pipeline_mode<synchronous>, transform_indices = @transform_2, window_bounds = array<i64: 1, 128>}, {pipeline_mode = #tpu.pipeline_mode<synchronous>, transform_indices = @transform_3, window_bounds = array<i64: 128, 128>}, {pipeline_mode = #tpu.pipeline_mode<synchronous>, transform_indices = @transform_4, window_bounds = array<i64: 1, 128>}, {pipeline_mode = #tpu.pipeline_mode<synchronous>, transform_indices = @transform_5, window_bounds = array<i64: 128, 128>}, {pipeline_mode = #tpu.pipeline_mode<synchronous>, transform_indices = @transform_6, window_bounds = array<i64: 1, 128>}, {transform_indices = @transform_7, window_bounds = array<i64: 2, 128>}]} {
    %c0 = arith.constant 0 : index
    %c0_0 = arith.constant 0 : index
    %0 = vector.load %arg2[%c0, %c0_0] : memref<2x256xbf16, #tpu.memory_space<vmem>>, vector<2x256xbf16>
    %c0_1 = arith.constant 0 : index
    %c0_2 = arith.constant 0 : index
    %1 = vector.load %arg3[%c0_1, %c0_2] : memref<256x128xbf16, #tpu.memory_space<vmem>>, vector<256x128xbf16>
    %cst = arith.constant dense<0.000000e+00> : vector<2x128xf32>
    %2 = tpu.matmul %0, %1, %cst {dimension_numbers = #tpu.dot_dimension_numbers<[1], [0], [0], [1], [0, 0, 1, 1], [], []>} : vector<2x256xbf16>, vector<256x128xbf16>, vector<2x128xf32> -> vector<2x128xf32>
    %c0_3 = arith.constant 0 : index
    %c0_4 = arith.constant 0 : index
    %3 = vector.load %arg4[%c0_3, %c0_4] : memref<1x128xf32, #tpu.memory_space<vmem>>, vector<1x128xf32>
    %4 = vector.broadcast %3 : vector<1x128xf32> to vector<2x128xf32>
    %5 = arith.addf %2, %4 : vector<2x128xf32>
    %cst_5 = arith.constant 0.000000e+00 : f32
    %6 = vector.broadcast %cst_5 : f32 to vector<2x128xf32>
    %7 = arith.maximumf %5, %6 : vector<2x128xf32>
    %c0_6 = arith.constant 0 : index
    %8 = memref.load %arg1[%c0_6] : memref<1xi32, #tpu.memory_space<smem>>
    %c668265263_i32 = arith.constant 668265263 : i32
    %9 = arith.muli %8, %c668265263_i32 : i32
    %c1_i32 = arith.constant 1 : i32
    %10 = arith.addi %arg0, %c1_i32 : i32
    %c-1028477387_i32 = arith.constant -1028477387 : i32
    %11 = arith.muli %10, %c-1028477387_i32 : i32
    %12 = arith.addi %9, %11 : i32
    %c1_i32_7 = arith.constant 1 : i32
    %c374761393_i32 = arith.constant 374761393 : i32
    %13 = arith.muli %c1_i32_7, %c374761393_i32 : i32
    %14 = arith.addi %12, %13 : i32
    %15 = tpu.iota {dimensions = array<i32: 0>} : vector<2x128xi32>
    %16 = tpu.iota {dimensions = array<i32: 1>} : vector<2x128xi32>
    %c-1640531527_i32 = arith.constant -1640531527 : i32
    %17 = vector.broadcast %c-1640531527_i32 : i32 to vector<2x128xi32>
    %18 = arith.muli %15, %17 : vector<2x128xi32>
    %c-2048144789_i32 = arith.constant -2048144789 : i32
    %19 = vector.broadcast %c-2048144789_i32 : i32 to vector<2x128xi32>
    %20 = arith.muli %16, %19 : vector<2x128xi32>
    %21 = arith.addi %18, %20 : vector<2x128xi32>
    %22 = vector.broadcast %14 : i32 to vector<2x128xi32>
    %23 = arith.addi %21, %22 : vector<2x128xi32>
    %c16_i32 = arith.constant 16 : i32
    %24 = vector.broadcast %c16_i32 : i32 to vector<2x128xi32>
    %25 = arith.shrui %23, %24 : vector<2x128xi32>
    %26 = arith.xori %23, %25 : vector<2x128xi32>
    %c2146121005_i32 = arith.constant 2146121005 : i32
    %27 = vector.broadcast %c2146121005_i32 : i32 to vector<2x128xi32>
    %28 = arith.muli %26, %27 : vector<2x128xi32>
    %c15_i32 = arith.constant 15 : i32
    %29 = vector.broadcast %c15_i32 : i32 to vector<2x128xi32>
    %30 = arith.shrui %28, %29 : vector<2x128xi32>
    %31 = arith.xori %28, %30 : vector<2x128xi32>
    %c-2073254261_i32 = arith.constant -2073254261 : i32
    %32 = vector.broadcast %c-2073254261_i32 : i32 to vector<2x128xi32>
    %33 = arith.muli %31, %32 : vector<2x128xi32>
    %c16_i32_8 = arith.constant 16 : i32
    %34 = vector.broadcast %c16_i32_8 : i32 to vector<2x128xi32>
    %35 = arith.shrui %33, %34 : vector<2x128xi32>
    %36 = arith.xori %33, %35 : vector<2x128xi32>
    %c8_i32 = arith.constant 8 : i32
    %37 = vector.broadcast %c8_i32 : i32 to vector<2x128xi32>
    %38 = arith.shrui %36, %37 : vector<2x128xi32>
    %c3355443_i32 = arith.constant 3355443 : i32
    %39 = vector.broadcast %c3355443_i32 : i32 to vector<2x128xi32>
    %40 = arith.cmpi uge, %38, %39 : vector<2x128xi32>
    %cst_9 = arith.constant 1.250000e+00 : f32
    %cst_10 = arith.constant 0.000000e+00 : f32
    %41 = vector.broadcast %cst_9 : f32 to vector<2x128xf32>
    %42 = vector.broadcast %cst_10 : f32 to vector<2x128xf32>
    %43 = arith.select %40, %41, %42 : vector<2x128xi1>, vector<2x128xf32>
    %44 = arith.mulf %7, %43 : vector<2x128xf32>
    %45 = arith.truncf %44 : vector<2x128xf32> to vector<2x128xbf16>
    %c0_11 = arith.constant 0 : index
    %c0_12 = arith.constant 0 : index
    %46 = vector.load %arg5[%c0_11, %c0_12] : memref<128x128xbf16, #tpu.memory_space<vmem>>, vector<128x128xbf16>
    %cst_13 = arith.constant dense<0.000000e+00> : vector<2x128xf32>
    %47 = tpu.matmul %45, %46, %cst_13 {dimension_numbers = #tpu.dot_dimension_numbers<[1], [0], [0], [1], [0, 0, 1, 1], [], []>} : vector<2x128xbf16>, vector<128x128xbf16>, vector<2x128xf32> -> vector<2x128xf32>
    %c0_14 = arith.constant 0 : index
    %c0_15 = arith.constant 0 : index
    %48 = vector.load %arg6[%c0_14, %c0_15] : memref<1x128xf32, #tpu.memory_space<vmem>>, vector<1x128xf32>
    %49 = vector.broadcast %48 : vector<1x128xf32> to vector<2x128xf32>
    %50 = arith.addf %47, %49 : vector<2x128xf32>
    %cst_16 = arith.constant 0.000000e+00 : f32
    %51 = vector.broadcast %cst_16 : f32 to vector<2x128xf32>
    %52 = arith.maximumf %50, %51 : vector<2x128xf32>
    %c0_17 = arith.constant 0 : index
    %53 = memref.load %arg1[%c0_17] : memref<1xi32, #tpu.memory_space<smem>>
    %c668265263_i32_18 = arith.constant 668265263 : i32
    %54 = arith.muli %53, %c668265263_i32_18 : i32
    %c1_i32_19 = arith.constant 1 : i32
    %55 = arith.addi %arg0, %c1_i32_19 : i32
    %c-1028477387_i32_20 = arith.constant -1028477387 : i32
    %56 = arith.muli %55, %c-1028477387_i32_20 : i32
    %57 = arith.addi %54, %56 : i32
    %c2_i32 = arith.constant 2 : i32
    %c374761393_i32_21 = arith.constant 374761393 : i32
    %58 = arith.muli %c2_i32, %c374761393_i32_21 : i32
    %59 = arith.addi %57, %58 : i32
    %60 = tpu.iota {dimensions = array<i32: 0>} : vector<2x128xi32>
    %61 = tpu.iota {dimensions = array<i32: 1>} : vector<2x128xi32>
    %c-1640531527_i32_22 = arith.constant -1640531527 : i32
    %62 = vector.broadcast %c-1640531527_i32_22 : i32 to vector<2x128xi32>
    %63 = arith.muli %60, %62 : vector<2x128xi32>
    %c-2048144789_i32_23 = arith.constant -2048144789 : i32
    %64 = vector.broadcast %c-2048144789_i32_23 : i32 to vector<2x128xi32>
    %65 = arith.muli %61, %64 : vector<2x128xi32>
    %66 = arith.addi %63, %65 : vector<2x128xi32>
    %67 = vector.broadcast %59 : i32 to vector<2x128xi32>
    %68 = arith.addi %66, %67 : vector<2x128xi32>
    %c16_i32_24 = arith.constant 16 : i32
    %69 = vector.broadcast %c16_i32_24 : i32 to vector<2x128xi32>
    %70 = arith.shrui %68, %69 : vector<2x128xi32>
    %71 = arith.xori %68, %70 : vector<2x128xi32>
    %c2146121005_i32_25 = arith.constant 2146121005 : i32
    %72 = vector.broadcast %c2146121005_i32_25 : i32 to vector<2x128xi32>
    %73 = arith.muli %71, %72 : vector<2x128xi32>
    %c15_i32_26 = arith.constant 15 : i32
    %74 = vector.broadcast %c15_i32_26 : i32 to vector<2x128xi32>
    %75 = arith.shrui %73, %74 : vector<2x128xi32>
    %76 = arith.xori %73, %75 : vector<2x128xi32>
    %c-2073254261_i32_27 = arith.constant -2073254261 : i32
    %77 = vector.broadcast %c-2073254261_i32_27 : i32 to vector<2x128xi32>
    %78 = arith.muli %76, %77 : vector<2x128xi32>
    %c16_i32_28 = arith.constant 16 : i32
    %79 = vector.broadcast %c16_i32_28 : i32 to vector<2x128xi32>
    %80 = arith.shrui %78, %79 : vector<2x128xi32>
    %81 = arith.xori %78, %80 : vector<2x128xi32>
    %c8_i32_29 = arith.constant 8 : i32
    %82 = vector.broadcast %c8_i32_29 : i32 to vector<2x128xi32>
    %83 = arith.shrui %81, %82 : vector<2x128xi32>
    %c8388608_i32 = arith.constant 8388608 : i32
    %84 = vector.broadcast %c8388608_i32 : i32 to vector<2x128xi32>
    %85 = arith.cmpi uge, %83, %84 : vector<2x128xi32>
    %cst_30 = arith.constant 2.000000e+00 : f32
    %cst_31 = arith.constant 0.000000e+00 : f32
    %86 = vector.broadcast %cst_30 : f32 to vector<2x128xf32>
    %87 = vector.broadcast %cst_31 : f32 to vector<2x128xf32>
    %88 = arith.select %85, %86, %87 : vector<2x128xi1>, vector<2x128xf32>
    %89 = arith.mulf %52, %88 : vector<2x128xf32>
    %90 = arith.truncf %89 : vector<2x128xf32> to vector<2x128xbf16>
    %c0_32 = arith.constant 0 : index
    %c0_33 = arith.constant 0 : index
    %91 = vector.load %arg7[%c0_32, %c0_33] : memref<128x128xbf16, #tpu.memory_space<vmem>>, vector<128x128xbf16>
    %cst_34 = arith.constant dense<0.000000e+00> : vector<2x128xf32>
    %92 = tpu.matmul %90, %91, %cst_34 {dimension_numbers = #tpu.dot_dimension_numbers<[1], [0], [0], [1], [0, 0, 1, 1], [], []>} : vector<2x128xbf16>, vector<128x128xbf16>, vector<2x128xf32> -> vector<2x128xf32>
    %c0_35 = arith.constant 0 : index
    %c0_36 = arith.constant 0 : index
    %93 = vector.load %arg8[%c0_35, %c0_36] : memref<1x128xf32, #tpu.memory_space<vmem>>, vector<1x128xf32>
    %94 = vector.broadcast %93 : vector<1x128xf32> to vector<2x128xf32>
    %95 = arith.addf %92, %94 : vector<2x128xf32>
    %c0_37 = arith.constant 0 : index
    %c0_38 = arith.constant 0 : index
    %96 = vector.load %arg9[%c0_37, %c0_38] : memref<2x128xf32, #tpu.memory_space<vmem>>, vector<2x128xf32>
    tpu.vector_store %arg9[%c0_37, %c0_38], %95 {strides = array<i32>} : memref<2x128xf32, #tpu.memory_space<vmem>>, vector<2x128xf32>,
    return
  }
  func.func @transform_0(%arg0: i32, %arg1: memref<1xi32, #tpu.memory_space<smem>>) -> (i32, i32) {
    %c0_i32 = arith.constant 0 : i32
    %c0_i32_0 = arith.constant 0 : i32
    return %arg0, %c0_i32 : i32, i32
  }
  func.func @transform_1(%arg0: i32, %arg1: memref<1xi32, #tpu.memory_space<smem>>) -> (i32, i32) {
    %c0_i32 = arith.constant 0 : i32
    %c0_i32_0 = arith.constant 0 : i32
    %c0_i32_1 = arith.constant 0 : i32
    return %c0_i32, %c0_i32_0 : i32, i32
  }
  func.func @transform_2(%arg0: i32, %arg1: memref<1xi32, #tpu.memory_space<smem>>) -> (i32, i32) {
    %c0_i32 = arith.constant 0 : i32
    %c0_i32_0 = arith.constant 0 : i32
    %c0_i32_1 = arith.constant 0 : i32
    return %c0_i32, %c0_i32_0 : i32, i32
  }
  func.func @transform_3(%arg0: i32, %arg1: memref<1xi32, #tpu.memory_space<smem>>) -> (i32, i32) {
    %c0_i32 = arith.constant 0 : i32
    %c0_i32_0 = arith.constant 0 : i32
    %c0_i32_1 = arith.constant 0 : i32
    return %c0_i32, %c0_i32_0 : i32, i32
  }
  func.func @transform_4(%arg0: i32, %arg1: memref<1xi32, #tpu.memory_space<smem>>) -> (i32, i32) {
    %c0_i32 = arith.constant 0 : i32
    %c0_i32_0 = arith.constant 0 : i32
    %c0_i32_1 = arith.constant 0 : i32
    return %c0_i32, %c0_i32_0 : i32, i32
  }
  func.func @transform_5(%arg0: i32, %arg1: memref<1xi32, #tpu.memory_space<smem>>) -> (i32, i32) {
    %c0_i32 = arith.constant 0 : i32
    %c0_i32_0 = arith.constant 0 : i32
    %c0_i32_1 = arith.constant 0 : i32
    return %c0_i32, %c0_i32_0 : i32, i32
  }
  func.func @transform_6(%arg0: i32, %arg1: memref<1xi32, #tpu.memory_space<smem>>) -> (i32, i32) {
    %c0_i32 = arith.constant 0 : i32
    %c0_i32_0 = arith.constant 0 : i32
    %c0_i32_1 = arith.constant 0 : i32
    return %c0_i32, %c0_i32_0 : i32, i32
  }
  func.func @transform_7(%arg0: i32, %arg1: memref<1xi32, #tpu.memory_space<smem>>) -> (i32, i32) {
    %c0_i32 = arith.constant 0 : i32
    %c0_i32_0 = arith.constant 0 : i32
    return %arg0, %c0_i32 : i32, i32
  }
}

</mosaic_0001>

<llo_original>
// kernel: tpu_custom_call.1
$region0: #{tpu_custom_call.1}
  #allocation0 [shape = 'u32[]', space=smem, size = 0x4, offset = 0x4, fixed_abs, tag = 'smem constant byte address 0x4 - core index']
  #allocation1 [shape = 'u32[72,128]{1,0:T(1,128)}', space=vmem, size = 0x9000, scoped, tag = 'internal scratch']
  #allocation2 [shape = 's32[1]{0}', space=sflag, size = 0x4, scoped, tag = 'scoped memory for tpu_custom_call.1']
  #allocation3 [shape = 's32[1]{0:T(128)S(6)}', space=smem, size = 0x200, scoped, tag = 'prefetched SMEM operand 0']
  %s0 = inlined_call_operand.<no memory space> [shape: s32[1], index: 0, kind: input, shape index: {}]
  %s1 = inlined_call_operand.vmem [shape: bf16[2,256], index: 1, kind: input, shape index: {}]
  %s2 = inlined_call_operand.hbm [shape: bf16[256,128], index: 2, kind: input, shape index: {}]
  %s3 = inlined_call_operand.vmem [shape: f32[1,128], index: 3, kind: input, shape index: {}]
  %s4 = inlined_call_operand.hbm [shape: bf16[128,128], index: 4, kind: input, shape index: {}]
  %s5 = inlined_call_operand.vmem [shape: f32[1,128], index: 5, kind: input, shape index: {}]
  %s6 = inlined_call_operand.hbm [shape: bf16[128,128], index: 6, kind: input, shape index: {}]
  %s7 = inlined_call_operand.vmem [shape: f32[1,128], index: 7, kind: input, shape index: {}]
  %s8 = inlined_call_operand.hbm [shape: f32[2,128], index: 8, kind: output, shape index: {}]
  %s9 = sld [smem:[#allocation0]]
  $region50: #{tpu_custom_call.1} parent=0
    _
  %s11 = ssub.s32 1, %s9
  %s12 = scalar_select 0, %s11, %s9
  %13 = sst [smem:[#allocation3]] %s0
  $region1: #{tpu_custom_call.1} parent=0
    #allocation4 [shape = 'u8[65536]{0}', space=vmem, size = 0x10000, scoped, tag = 'input window, operand 2, single buffered']
    #allocation5 [shape = 's32[1]{0}', space=sflag, size = 0x4, scoped, tag = 'scoped memory for tpu_custom_call.1']
    #allocation6 [shape = 's32[1]{0}', space=sflag, size = 0x4, scoped, tag = 'scoped memory for tpu_custom_call.1']
    #allocation7 [shape = 'u8[32768]{0}', space=vmem, size = 0x8000, scoped, tag = 'input window, operand 4, single buffered']
    #allocation8 [shape = 's32[1]{0}', space=sflag, size = 0x4, scoped, tag = 'scoped memory for tpu_custom_call.1']
    #allocation9 [shape = 'u8[32768]{0}', space=vmem, size = 0x8000, scoped, tag = 'input window, operand 6, single buffered']
    #allocation10 [shape = 'u8[1024]{0}', space=vmem, size = 0x400, scoped, tag = 'output window, operand 0, single buffered']
    %14 = vsyncpa [#allocation5], 0
    %15 = vsyncpa [#allocation8], 0
    %16 = vsyncpa [#allocation6], 0
    // Predicated region
    $region2: #{tpu_custom_call.1} parent=1 // pred_check
      _
    $region3: #{tpu_custom_call.1} parent=1 // pred_check_branch
      %18 = sbr.rel (0) target = $region5
    $region4: #{tpu_custom_call.1} parent=1 // pred_region
      _
    $region5: #{tpu_custom_call.1} parent=1 // pred_fallthru
      _
    // Predicated region
    $region6: #{tpu_custom_call.1} parent=1 // pred_check
      _
    $region7: #{tpu_custom_call.1} parent=1 // pred_check_branch
      %20 = sbr.rel (0) target = $region9
    $region8: #{tpu_custom_call.1} parent=1 // pred_region
      %22 = vsyncadd [#allocation5], 0
      %s23 = sshll.u32 %s2, 4
      %s24 = int_to_ptr.hbm [resolvable:$true] %s23
      %s25 = sshll.u32 [#allocation4], 4
      %s26 = int_to_ptr.vmem [resolvable:$true] %s25
      %31 = dma.hbm_to_vmem [thread:$0]  %s24, 2048, %s26, [#allocation5], 64, 64, 4
    $region9: #{tpu_custom_call.1} parent=1 // pred_fallthru
      _
    // Predicated region
    $region10: #{tpu_custom_call.1} parent=1 // pred_check
      _
    $region11: #{tpu_custom_call.1} parent=1 // pred_check_branch
      %33 = sbr.rel (0) target = $region13
    $region12: #{tpu_custom_call.1} parent=1 // pred_region
      _
    $region13: #{tpu_custom_call.1} parent=1 // pred_fallthru
      _
    // Predicated region
    $region14: #{tpu_custom_call.1} parent=1 // pred_check
      _
    $region15: #{tpu_custom_call.1} parent=1 // pred_check_branch
      %35 = sbr.rel (0) target = $region17
    $region16: #{tpu_custom_call.1} parent=1 // pred_region
      %37 = vsyncadd [#allocation8], 0
      %s38 = sshll.u32 %s4, 4
      %s39 = int_to_ptr.hbm [resolvable:$true] %s38
      %s40 = sshll.u32 [#allocation7], 4
      %s41 = int_to_ptr.vmem [resolvable:$true] %s40
      %46 = dma.hbm_to_vmem [thread:$0]  %s39, 1024, %s41, [#allocation8], 64, 64, 4
    $region17: #{tpu_custom_call.1} parent=1 // pred_fallthru
      _
    // Predicated region
    $region18: #{tpu_custom_call.1} parent=1 // pred_check
      _
    $region19: #{tpu_custom_call.1} parent=1 // pred_check_branch
      %48 = sbr.rel (0) target = $region21
    $region20: #{tpu_custom_call.1} parent=1 // pred_region
      _
    $region21: #{tpu_custom_call.1} parent=1 // pred_fallthru
      _
    // Predicated region
    $region22: #{tpu_custom_call.1} parent=1 // pred_check
      _
    $region23: #{tpu_custom_call.1} parent=1 // pred_check_branch
      %50 = sbr.rel (0) target = $region25
    $region24: #{tpu_custom_call.1} parent=1 // pred_region
      %52 = vsyncadd [#allocation8], 0
      %s53 = sshll.u32 %s6, 4
      %s54 = int_to_ptr.hbm [resolvable:$true] %s53
      %s55 = sshll.u32 [#allocation9], 4
      %s56 = int_to_ptr.vmem [resolvable:$true] %s55
      %61 = dma.hbm_to_vmem [thread:$0]  %s54, 1024, %s56, [#allocation8], 64, 64, 4
    $region25: #{tpu_custom_call.1} parent=1 // pred_fallthru
      _
    // Predicated region
    $region26: #{tpu_custom_call.1} parent=1 // pred_check
      _
    $region27: #{tpu_custom_call.1} parent=1 // pred_check_branch
      %63 = sbr.rel (0) target = $region29
    $region28: #{tpu_custom_call.1} parent=1 // pred_region
      _
    $region29: #{tpu_custom_call.1} parent=1 // pred_fallthru
      _
    // Predicated region
    $region30: #{tpu_custom_call.1} parent=1 // pred_check
      _
    $region31: #{tpu_custom_call.1} parent=1 // pred_check_branch
      %65 = sbr.rel (0) target = $region33
    $region32: #{tpu_custom_call.1} parent=1 // pred_region
      %67 = dma.done [#allocation5], 2048
    $region33: #{tpu_custom_call.1} parent=1 // pred_fallthru
      _
    // Predicated region
    $region34: #{tpu_custom_call.1} parent=1 // pred_check
      _
    $region35: #{tpu_custom_call.1} parent=1 // pred_check_branch
      %69 = sbr.rel (0) target = $region37
    $region36: #{tpu_custom_call.1} parent=1 // pred_region
      %71 = dma.done [#allocation8], 1024
    $region37: #{tpu_custom_call.1} parent=1 // pred_fallthru
      _
    // Predicated region
    $region38: #{tpu_custom_call.1} parent=1 // pred_check
      _
    $region39: #{tpu_custom_call.1} parent=1 // pred_check_branch
      %73 = sbr.rel (0) target = $region41
    $region40: #{tpu_custom_call.1} parent=1 // pred_region
      %75 = dma.done [#allocation8], 1024
    $region41: #{tpu_custom_call.1} parent=1 // pred_fallthru
      _
    %v76 = vld [vmem:[%s1] sm:$0x3]
    %v77 = vld [vmem:[#allocation4] sm:$0xf]
    %v78 = vld [vmem:[#allocation4 + $0x4] sm:$0xf]
    %v79 = vld [vmem:[#allocation4 + $0x8] sm:$0xf]
    %v80 = vld [vmem:[#allocation4 + $0xc] sm:$0xf]
    %v81 = vld [vmem:[#allocation4 + $0x10] sm:$0xf]
    %v82 = vld [vmem:[#allocation4 + $0x14] sm:$0xf]
    %v83 = vld [vmem:[#allocation4 + $0x18] sm:$0xf]
    %v84 = vld [vmem:[#allocation4 + $0x1c] sm:$0xf]
    %v85 = vld [vmem:[#allocation4 + $0x20] sm:$0xf]
    %v86 = vld [vmem:[#allocation4 + $0x24] sm:$0xf]
    %v87 = vld [vmem:[#allocation4 + $0x28] sm:$0xf]
    %v88 = vld [vmem:[#allocation4 + $0x2c] sm:$0xf]
    %v89 = vld [vmem:[#allocation4 + $0x30] sm:$0xf]
    %v90 = vld [vmem:[#allocation4 + $0x34] sm:$0xf]
    %v91 = vld [vmem:[#allocation4 + $0x38] sm:$0xf]
    %v92 = vld [vmem:[#allocation4 + $0x3c] sm:$0xf]
    %v93 = vld [vmem:[#allocation4 + $0x40] sm:$0xf]
    %v94 = vld [vmem:[#allocation4 + $0x44] sm:$0xf]
    %v95 = vld [vmem:[#allocation4 + $0x48] sm:$0xf]
    %v96 = vld [vmem:[#allocation4 + $0x4c] sm:$0xf]
    %v97 = vld [vmem:[#allocation4 + $0x50] sm:$0xf]
    %v98 = vld [vmem:[#allocation4 + $0x54] sm:$0xf]
    %v99 = vld [vmem:[#allocation4 + $0x58] sm:$0xf]
    %v100 = vld [vmem:[#allocation4 + $0x5c] sm:$0xf]
    %v101 = vld [vmem:[#allocation4 + $0x60] sm:$0xf]
    %v102 = vld [vmem:[#allocation4 + $0x64] sm:$0xf]
    %v103 = vld [vmem:[#allocation4 + $0x68] sm:$0xf]
    %v104 = vld [vmem:[#allocation4 + $0x6c] sm:$0xf]
    %v105 = vld [vmem:[#allocation4 + $0x70] sm:$0xf]
    %v106 = vld [vmem:[#allocation4 + $0x74] sm:$0xf]
    %v107 = vld [vmem:[#allocation4 + $0x78] sm:$0xf]
    %v108 = vld [vmem:[#allocation4 + $0x7c] sm:$0xf]
    %v109 = vld [vmem:[%s3] sm:$0x1]
    %v111 = vperm.slane %v109, 0
    %114 = vst [vmem:[#allocation1] ss:$9 sm:$0xff] %v76
    %v115 = vld [vmem:[#allocation1] sm:$0xff]
    %v116 = vld [vmem:[#allocation1 + $0x9] sm:$0xff]
    %v151 = vunpack.c.l.b16 %v77
    %v152 = vunpack.c.l.b16 %v78
    %v153 = vunpack.c.l.b16 %v79
    %v154 = vunpack.c.l.b16 %v80
    %v155 = vunpack.c.l.b16 %v81
    %v156 = vunpack.c.l.b16 %v82
    %v157 = vunpack.c.l.b16 %v83
    %v158 = vunpack.c.l.b16 %v84
    %v159 = vunpack.c.l.b16 %v85
    %v160 = vunpack.c.l.b16 %v86
    %v161 = vunpack.c.l.b16 %v87
    %v162 = vunpack.c.l.b16 %v88
    %v163 = vunpack.c.l.b16 %v89
    %v164 = vunpack.c.l.b16 %v90
    %v165 = vunpack.c.l.b16 %v91
    %v166 = vunpack.c.l.b16 %v92
    %v167 = vunpack.c.l.b16 %v93
    %v168 = vunpack.c.l.b16 %v94
    %v169 = vunpack.c.l.b16 %v95
    %v170 = vunpack.c.l.b16 %v96
    %v171 = vunpack.c.l.b16 %v97
    %v172 = vunpack.c.l.b16 %v98
    %v173 = vunpack.c.l.b16 %v99
    %v174 = vunpack.c.l.b16 %v100
    %v175 = vunpack.c.l.b16 %v101
    %v176 = vunpack.c.l.b16 %v102
    %v177 = vunpack.c.l.b16 %v103
    %v178 = vunpack.c.l.b16 %v104
    %v179 = vunpack.c.l.b16 %v105
    %v180 = vunpack.c.l.b16 %v106
    %v181 = vunpack.c.l.b16 %v107
    %v182 = vunpack.c.l.b16 %v108
    %v183 = vpack.c.b16 %v152, %v151
    %v184 = vpack.c.b16 %v154, %v153
    %v185 = vpack.c.b16 %v156, %v155
    %v186 = vpack.c.b16 %v158, %v157
    %v187 = vpack.c.b16 %v160, %v159
    %v188 = vpack.c.b16 %v162, %v161
    %v189 = vpack.c.b16 %v164, %v163
    %v190 = vpack.c.b16 %v166, %v165
    %v191 = vpack.c.b16 %v168, %v167
    %v192 = vpack.c.b16 %v170, %v169
    %v193 = vpack.c.b16 %v172, %v171
    %v194 = vpack.c.b16 %v174, %v173
    %v195 = vpack.c.b16 %v176, %v175
    %v196 = vpack.c.b16 %v178, %v177
    %v197 = vpack.c.b16 %v180, %v179
    %v198 = vpack.c.b16 %v182, %v181
    %215 = vmatpush.bf16.msra.mxu0 %v190
    %216 = vmatpush.bf16.msra.mxu0 %v189
    %217 = vmatpush.bf16.msra.mxu0 %v188
    %218 = vmatpush.bf16.msra.mxu0 %v187
    %219 = vmatpush.bf16.msra.mxu0 %v186
    %220 = vmatpush.bf16.msra.mxu0 %v185
    %221 = vmatpush.bf16.msra.mxu0 %v184
    %222 = vmatpush.bf16.msra.mxu0 %v183
    %223 = vmatmul.bf16.gmra.mxu0 %v115
    %v224 = vpop.f32.mrf.mxu0
    %v225 = vadd.f32 %v111, %v224
    %v226 = vpop.f32.mrf.mxu0
    %227 = vdwg.mxu0
    %228 = vmatpush.bf16.msra.mxu0 %v198
    %229 = vmatpush.bf16.msra.mxu0 %v197
    %230 = vmatpush.bf16.msra.mxu0 %v196
    %231 = vmatpush.bf16.msra.mxu0 %v195
    %232 = vmatpush.bf16.msra.mxu0 %v194
    %233 = vmatpush.bf16.msra.mxu0 %v193
    %234 = vmatpush.bf16.msra.mxu0 %v192
    %235 = vmatpush.bf16.msra.mxu0 %v191
    %236 = vmatmul.bf16.gmra.mxu0 %v116
    %v237 = vpop.f32.mrf.mxu0
    %v238 = vadd.f32 %v225, %v237
    %v239 = vpop.f32.mrf.mxu0
    %240 = vdwg.mxu0
    %v241 = vmax.f32 %v238, 0.0
    %s242 = sld [smem:[#allocation3]]
    %s243 = smul.u32 %s242, 668265263
    %s244 = sadd.s32 0, 1
    %s245 = smul.u32 %s244, 3266489909
    %s246 = sadd.s32 %s243, %s245
    %s247 = sadd.s32 %s246, 374761393
    %v248 = vlaneseq
    %v249 = vshrl.u32 %v248, 7
    %v250 = vlaneseq
    %v251 = vand.u32 %v250, 127
    %v252 = vmul.u32 %v249, 2654435769
    %v253 = vmul.u32 %v251, 2246822507
    %v254 = vadd.s32 %v252, %v253
    %v255 = vstv %s247
    %v256 = vadd.s32 %v254, %v255
    %v257 = vshrl.u32 %v256, 16
    %v258 = vxor.u32 %v256, %v257
    %v259 = vmul.u32 %v258, 2146121005
    %v260 = vshrl.u32 %v259, 15
    %v261 = vxor.u32 %v259, %v260
    %v262 = vmul.u32 %v261, 2221713035
    %v263 = vshrl.u32 %v262, 16
    %v264 = vxor.u32 %v262, %v263
    %v265 = vshrl.u32 %v264, 8
    %v266 = vadd.s32 %v265, 2147483648
    %vm268 = vcmp.ge.s32.totalorder %v266, 2150839091
    %v269 = vsel %vm268, 1.25, 0.0
    %v270 = vmul.f32 %v241, %v269
    %v271 = vpack.c.bf16 %v270, %v270
    %v272 = vld [vmem:[#allocation7] sm:$0xf]
    %v273 = vld [vmem:[#allocation7 + $0x4] sm:$0xf]
    %v274 = vld [vmem:[#allocation7 + $0x8] sm:$0xf]
    %v275 = vld [vmem:[#allocation7 + $0xc] sm:$0xf]
    %v276 = vld [vmem:[#allocation7 + $0x10] sm:$0xf]
    %v277 = vld [vmem:[#allocation7 + $0x14] sm:$0xf]
    %v278 = vld [vmem:[#allocation7 + $0x18] sm:$0xf]
    %v279 = vld [vmem:[#allocation7 + $0x1c] sm:$0xf]
    %v280 = vld [vmem:[#allocation7 + $0x20] sm:$0xf]
    %v281 = vld [vmem:[#allocation7 + $0x24] sm:$0xf]
    %v282 = vld [vmem:[#allocation7 + $0x28] sm:$0xf]
    %v283 = vld [vmem:[#allocation7 + $0x2c] sm:$0xf]
    %v284 = vld [vmem:[#allocation7 + $0x30] sm:$0xf]
    %v285 = vld [vmem:[#allocation7 + $0x34] sm:$0xf]
    %v286 = vld [vmem:[#allocation7 + $0x38] sm:$0xf]
    %v287 = vld [vmem:[#allocation7 + $0x3c] sm:$0xf]
    %v288 = vld [vmem:[%s5] sm:$0x1]
    %v290 = vperm.slane %v288, 0
    %v308 = vunpack.c.l.b16 %v272
    %v309 = vunpack.c.l.b16 %v273
    %v310 = vunpack.c.l.b16 %v274
    %v311 = vunpack.c.l.b16 %v275
    %v312 = vunpack.c.l.b16 %v276
    %v313 = vunpack.c.l.b16 %v277
    %v314 = vunpack.c.l.b16 %v278
    %v315 = vunpack.c.l.b16 %v279
    %v316 = vunpack.c.l.b16 %v280
    %v317 = vunpack.c.l.b16 %v281
    %v318 = vunpack.c.l.b16 %v282
    %v319 = vunpack.c.l.b16 %v283
    %v320 = vunpack.c.l.b16 %v284
    %v321 = vunpack.c.l.b16 %v285
    %v322 = vunpack.c.l.b16 %v286
    %v323 = vunpack.c.l.b16 %v287
    %v324 = vpack.c.b16 %v309, %v308
    %v325 = vpack.c.b16 %v311, %v310
    %v326 = vpack.c.b16 %v313, %v312
    %v327 = vpack.c.b16 %v315, %v314
    %v328 = vpack.c.b16 %v317, %v316
    %v329 = vpack.c.b16 %v319, %v318
    %v330 = vpack.c.b16 %v321, %v320
    %v331 = vpack.c.b16 %v323, %v322
    %340 = vmatpush.bf16.msra.mxu0 %v331
    %341 = vmatpush.bf16.msra.mxu0 %v330
    %342 = vmatpush.bf16.msra.mxu0 %v329
    %343 = vmatpush.bf16.msra.mxu0 %v328
    %344 = vmatpush.bf16.msra.mxu0 %v327
    %345 = vmatpush.bf16.msra.mxu0 %v326
    %346 = vmatpush.bf16.msra.mxu0 %v325
    %347 = vmatpush.bf16.msra.mxu0 %v324
    %348 = vmatmul.bf16.gmra.mxu0 %v271
    %v349 = vpop.f32.mrf.mxu0
    %v350 = vadd.f32 %v290, %v349
    %v351 = vpop.f32.mrf.mxu0
    %352 = vdwg.mxu0
    %v353 = vmax.f32 %v350, 0.0
    %s354 = sadd.s32 %s246, 749522786
    %v355 = vstv %s354
    %v356 = vadd.s32 %v254, %v355
    %v357 = vshrl.u32 %v356, 16
    %v358 = vxor.u32 %v356, %v357
    %v359 = vmul.u32 %v358, 2146121005
    %v360 = vshrl.u32 %v359, 15
    %v361 = vxor.u32 %v359, %v360
    %v362 = vmul.u32 %v361, 2221713035
    %v363 = vshrl.u32 %v362, 16
    %v364 = vxor.u32 %v362, %v363
    %v365 = vshrl.u32 %v364, 8
    %v366 = vadd.s32 %v365, 2147483648
    %vm368 = vcmp.ge.s32.totalorder %v366, 2155872256
    %v369 = vsel %vm368, 2.0, 0.0
    %v370 = vmul.f32 %v353, %v369
    %v371 = vpack.c.bf16 %v370, %v370
    %v372 = vld [vmem:[#allocation9] sm:$0xf]
    %v373 = vld [vmem:[#allocation9 + $0x4] sm:$0xf]
    %v374 = vld [vmem:[#allocation9 + $0x8] sm:$0xf]
    %v375 = vld [vmem:[#allocation9 + $0xc] sm:$0xf]
    %v376 = vld [vmem:[#allocation9 + $0x10] sm:$0xf]
    %v377 = vld [vmem:[#allocation9 + $0x14] sm:$0xf]
    %v378 = vld [vmem:[#allocation9 + $0x18] sm:$0xf]
    %v379 = vld [vmem:[#allocation9 + $0x1c] sm:$0xf]
    %v380 = vld [vmem:[#allocation9 + $0x20] sm:$0xf]
    %v381 = vld [vmem:[#allocation9 + $0x24] sm:$0xf]
    %v382 = vld [vmem:[#allocation9 + $0x28] sm:$0xf]
    %v383 = vld [vmem:[#allocation9 + $0x2c] sm:$0xf]
    %v384 = vld [vmem:[#allocation9 + $0x30] sm:$0xf]
    %v385 = vld [vmem:[#allocation9 + $0x34] sm:$0xf]
    %v386 = vld [vmem:[#allocation9 + $0x38] sm:$0xf]
    %v387 = vld [vmem:[#allocation9 + $0x3c] sm:$0xf]
    %v388 = vld [vmem:[%s7] sm:$0x1]
    %v390 = vperm.slane %v388, 0
    %v408 = vunpack.c.l.b16 %v372
    %v409 = vunpack.c.l.b16 %v373
    %v410 = vunpack.c.l.b16 %v374
    %v411 = vunpack.c.l.b16 %v375
    %v412 = vunpack.c.l.b16 %v376
    %v413 = vunpack.c.l.b16 %v377
    %v414 = vunpack.c.l.b16 %v378
    %v415 = vunpack.c.l.b16 %v379
    %v416 = vunpack.c.l.b16 %v380
    %v417 = vunpack.c.l.b16 %v381
    %v418 = vunpack.c.l.b16 %v382
    %v419 = vunpack.c.l.b16 %v383
    %v420 = vunpack.c.l.b16 %v384
    %v421 = vunpack.c.l.b16 %v385
    %v422 = vunpack.c.l.b16 %v386
    %v423 = vunpack.c.l.b16 %v387
    %v424 = vpack.c.b16 %v409, %v408
    %v425 = vpack.c.b16 %v411, %v410
    %v426 = vpack.c.b16 %v413, %v412
    %v427 = vpack.c.b16 %v415, %v414
    %v428 = vpack.c.b16 %v417, %v416
    %v429 = vpack.c.b16 %v419, %v418
    %v430 = vpack.c.b16 %v421, %v420
    %v431 = vpack.c.b16 %v423, %v422
    %440 = vmatpush.bf16.msra.mxu0 %v431
    %441 = vmatpush.bf16.msra.mxu0 %v430
    %442 = vmatpush.bf16.msra.mxu0 %v429
    %443 = vmatpush.bf16.msra.mxu0 %v428
    %444 = vmatpush.bf16.msra.mxu0 %v427
    %445 = vmatpush.bf16.msra.mxu0 %v426
    %446 = vmatpush.bf16.msra.mxu0 %v425
    %447 = vmatpush.bf16.msra.mxu0 %v424
    %448 = vmatmul.bf16.gmra.mxu0 %v371
    %v449 = vpop.f32.mrf.mxu0
    %v450 = vadd.f32 %v390, %v449
    %v451 = vpop.f32.mrf.mxu0
    %452 = vdwg.mxu0
    %453 = vst [vmem:[#allocation10] sm:$0x3] %v450
    // Predicated region
    $region42: #{tpu_custom_call.1} parent=1 // pred_check
      _
    $region43: #{tpu_custom_call.1} parent=1 // pred_check_branch
      %455 = sbr.rel (0) target = $region45
    $region44: #{tpu_custom_call.1} parent=1 // pred_region
      %457 = vsyncadd [#allocation6], 0
      %s459 = sshll.u32 [#allocation10], 4
      %s460 = int_to_ptr.vmem [resolvable:$true] %s459
      %s461 = sshll.u32 %s8, 4
      %s462 = int_to_ptr.hbm [resolvable:$true] %s461
      %464 = dma.vmem_to_hbm [thread:$0]  %s460, 32, %s462, [#allocation6]
    $region45: #{tpu_custom_call.1} parent=1 // pred_fallthru
      _
    // Predicated region
    $region46: #{tpu_custom_call.1} parent=1 // pred_check
      _
    $region47: #{tpu_custom_call.1} parent=1 // pred_check_branch
      %466 = sbr.rel (0) target = $region49
    $region48: #{tpu_custom_call.1} parent=1 // pred_region
      %468 = dma.done [#allocation6], 32
    $region49: #{tpu_custom_call.1} parent=1 // pred_fallthru
      _
    %469 = vsyncpa [#allocation5], 1
    %470 = vsyncpa [#allocation8], 1
    %471 = vsyncpa [#allocation6], 1

// kernel: tpu_custom_call.1
$region0: #{tpu_custom_call.1}
  #allocation0 [shape = 'u32[]', space=smem, size = 0x4, offset = 0x4, fixed_abs, tag = 'smem constant byte address 0x4 - core index']
  #allocation1 [shape = 'u32[72,128]{1,0:T(1,128)}', space=vmem, size = 0x9000, scoped, tag = 'internal scratch']
  #allocation2 [shape = 's32[1]{0}', space=sflag, size = 0x4, scoped, tag = 'scoped memory for tpu_custom_call.1']
  #allocation3 [shape = 's32[1]{0:T(128)S(6)}', space=smem, size = 0x200, scoped, tag = 'prefetched SMEM operand 0']
  %s0 = inlined_call_operand.<no memory space> [shape: s32[1], index: 0, kind: input, shape index: {}]
  %s1 = inlined_call_operand.vmem [shape: bf16[2,256], index: 1, kind: input, shape index: {}]
  %s2 = inlined_call_operand.hbm [shape: bf16[256,128], index: 2, kind: input, shape index: {}]
  %s3 = inlined_call_operand.vmem [shape: f32[1,128], index: 3, kind: input, shape index: {}]
  %s4 = inlined_call_operand.hbm [shape: bf16[128,128], index: 4, kind: input, shape index: {}]
  %s5 = inlined_call_operand.vmem [shape: f32[1,128], index: 5, kind: input, shape index: {}]
  %s6 = inlined_call_operand.hbm [shape: bf16[128,128], index: 6, kind: input, shape index: {}]
  %s7 = inlined_call_operand.vmem [shape: f32[1,128], index: 7, kind: input, shape index: {}]
  %s8 = inlined_call_operand.hbm [shape: f32[2,128], index: 8, kind: output, shape index: {}]
  %s9 = sld [smem:[#allocation0]]
  $region50: #{tpu_custom_call.1} parent=0
    _
  %s11 = ssub.s32 1, %s9
  %s12 = scalar_select 0, %s11, %s9
  %13 = sst [smem:[#allocation3]] %s0
  $region1: #{tpu_custom_call.1} parent=0
    #allocation4 [shape = 'u8[65536]{0}', space=vmem, size = 0x10000, scoped, tag = 'input window, operand 2, single buffered']
    #allocation5 [shape = 's32[1]{0}', space=sflag, size = 0x4, scoped, tag = 'scoped memory for tpu_custom_call.1']
    #allocation6 [shape = 's32[1]{0}', space=sflag, size = 0x4, scoped, tag = 'scoped memory for tpu_custom_call.1']
    #allocation7 [shape = 'u8[32768]{0}', space=vmem, size = 0x8000, scoped, tag = 'input window, operand 4, single buffered']
    #allocation8 [shape = 's32[1]{0}', space=sflag, size = 0x4, scoped, tag = 'scoped memory for tpu_custom_call.1']
    #allocation9 [shape = 'u8[32768]{0}', space=vmem, size = 0x8000, scoped, tag = 'input window, operand 6, single buffered']
    #allocation10 [shape = 'u8[1024]{0}', space=vmem, size = 0x400, scoped, tag = 'output window, operand 0, single buffered']
    %14 = vsyncpa [#allocation5], 0
    %15 = vsyncpa [#allocation8], 0
    %16 = vsyncpa [#allocation6], 0
    // Predicated region
    $region2: #{tpu_custom_call.1} parent=1 // pred_check
      _
    $region3: #{tpu_custom_call.1} parent=1 // pred_check_branch
      %18 = sbr.rel (0) target = $region5
    $region4: #{tpu_custom_call.1} parent=1 // pred_region
      _
    $region5: #{tpu_custom_call.1} parent=1 // pred_fallthru
      _
    // Predicated region
    $region6: #{tpu_custom_call.1} parent=1 // pred_check
      _
    $region7: #{tpu_custom_call.1} parent=1 // pred_check_branch
      %20 = sbr.rel (0) target = $region9
    $region8: #{tpu_custom_call.1} parent=1 // pred_region
      %22 = vsyncadd [#allocation5], 0
      %s23 = sshll.u32 %s2, 4
      %s24 = int_to_ptr.hbm [resolvable:$true] %s23
      %s25 = sshll.u32 [#allocation4], 4
      %s26 = int_to_ptr.vmem [resolvable:$true] %s25
      %31 = dma.hbm_to_vmem [thread:$0]  %s24, 2048, %s26, [#allocation5], 64, 64, 4
    $region9: #{tpu_custom_call.1} parent=1 // pred_fallthru
      _
    // Predicated region
    $region10: #{tpu_custom_call.1} parent=1 // pred_check
      _
    $region11: #{tpu_custom_call.1} parent=1 // pred_check_branch
      %33 = sbr.rel (0) target = $region13
    $region12: #{tpu_custom_call.1} parent=1 // pred_region
      _
    $region13: #{tpu_custom_call.1} parent=1 // pred_fallthru
      _
    // Predicated region
    $region14: #{tpu_custom_call.1} parent=1 // pred_check
      _
    $region15: #{tpu_custom_call.1} parent=1 // pred_check_branch
      %35 = sbr.rel (0) target = $region17
    $region16: #{tpu_custom_call.1} parent=1 // pred_region
      %37 = vsyncadd [#allocation8], 0
      %s38 = sshll.u32 %s4, 4
      %s39 = int_to_ptr.hbm [resolvable:$true] %s38
      %s40 = sshll.u32 [#allocation7], 4
      %s41 = int_to_ptr.vmem [resolvable:$true] %s40
      %46 = dma.hbm_to_vmem [thread:$0]  %s39, 1024, %s41, [#allocation8], 64, 64, 4
    $region17: #{tpu_custom_call.1} parent=1 // pred_fallthru
      _
    // Predicated region
    $region18: #{tpu_custom_call.1} parent=1 // pred_check
      _
    $region19: #{tpu_custom_call.1} parent=1 // pred_check_branch
      %48 = sbr.rel (0) target = $region21
    $region20: #{tpu_custom_call.1} parent=1 // pred_region
      _
    $region21: #{tpu_custom_call.1} parent=1 // pred_fallthru
      _
    // Predicated region
    $region22: #{tpu_custom_call.1} parent=1 // pred_check
      _
    $region23: #{tpu_custom_call.1} parent=1 // pred_check_branch
      %50 = sbr.rel (0) target = $region25
    $region24: #{tpu_custom_call.1} parent=1 // pred_region
      %52 = vsyncadd [#allocation8], 0
      %s53 = sshll.u32 %s6, 4
      %s54 = int_to_ptr.hbm [resolvable:$true] %s53
      %s55 = sshll.u32 [#allocation9], 4
      %s56 = int_to_ptr.vmem [resolvable:$true] %s55
      %61 = dma.hbm_to_vmem [thread:$0]  %s54, 1024, %s56, [#allocation8], 64, 64, 4
    $region25: #{tpu_custom_call.1} parent=1 // pred_fallthru
      _
    // Predicated region
    $region26: #{tpu_custom_call.1} parent=1 // pred_check
      _
    $region27: #{tpu_custom_call.1} parent=1 // pred_check_branch
      %63 = sbr.rel (0) target = $region29
    $region28: #{tpu_custom_call.1} parent=1 // pred_region
      _
    $region29: #{tpu_custom_call.1} parent=1 // pred_fallthru
      _
    // Predicated region
    $region30: #{tpu_custom_call.1} parent=1 // pred_check
      _
    $region31: #{tpu_custom_call.1} parent=1 // pred_check_branch
      %65 = sbr.rel (0) target = $region33
    $region32: #{tpu_custom_call.1} parent=1 // pred_region
      %67 = dma.done [#allocation5], 2048
    $region33: #{tpu_custom_call.1} parent=1 // pred_fallthru
      _
    // Predicated region
    $region34: #{tpu_custom_call.1} parent=1 // pred_check
      _
    $region35: #{tpu_custom_call.1} parent=1 // pred_check_branch
      %69 = sbr.rel (0) target = $region37
    $region36: #{tpu_custom_call.1} parent=1 // pred_region
      %71 = dma.done [#allocation8], 1024
    $region37: #{tpu_custom_call.1} parent=1 // pred_fallthru
      _
    // Predicated region
    $region38: #{tpu_custom_call.1} parent=1 // pred_check
      _
    $region39: #{tpu_custom_call.1} parent=1 // pred_check_branch
      %73 = sbr.rel (0) target = $region41
    $region40: #{tpu_custom_call.1} parent=1 // pred_region
      %75 = dma.done [#allocation8], 1024
    $region41: #{tpu_custom_call.1} parent=1 // pred_fallthru
      _
    %v76 = vld [vmem:[%s1] sm:$0x3]
    %v77 = vld [vmem:[#allocation4] sm:$0xf]
    %v78 = vld [vmem:[#allocation4 + $0x4] sm:$0xf]
    %v79 = vld [vmem:[#allocation4 + $0x8] sm:$0xf]
    %v80 = vld [vmem:[#allocation4 + $0xc] sm:$0xf]
    %v81 = vld [vmem:[#allocation4 + $0x10] sm:$0xf]
    %v82 = vld [vmem:[#allocation4 + $0x14] sm:$0xf]
    %v83 = vld [vmem:[#allocation4 + $0x18] sm:$0xf]
    %v84 = vld [vmem:[#allocation4 + $0x1c] sm:$0xf]
    %v85 = vld [vmem:[#allocation4 + $0x20] sm:$0xf]
    %v86 = vld [vmem:[#allocation4 + $0x24] sm:$0xf]
    %v87 = vld [vmem:[#allocation4 + $0x28] sm:$0xf]
    %v88 = vld [vmem:[#allocation4 + $0x2c] sm:$0xf]
    %v89 = vld [vmem:[#allocation4 + $0x30] sm:$0xf]
    %v90 = vld [vmem:[#allocation4 + $0x34] sm:$0xf]
    %v91 = vld [vmem:[#allocation4 + $0x38] sm:$0xf]
    %v92 = vld [vmem:[#allocation4 + $0x3c] sm:$0xf]
    %v93 = vld [vmem:[#allocation4 + $0x40] sm:$0xf]
    %v94 = vld [vmem:[#allocation4 + $0x44] sm:$0xf]
    %v95 = vld [vmem:[#allocation4 + $0x48] sm:$0xf]
    %v96 = vld [vmem:[#allocation4 + $0x4c] sm:$0xf]
    %v97 = vld [vmem:[#allocation4 + $0x50] sm:$0xf]
    %v98 = vld [vmem:[#allocation4 + $0x54] sm:$0xf]
    %v99 = vld [vmem:[#allocation4 + $0x58] sm:$0xf]
    %v100 = vld [vmem:[#allocation4 + $0x5c] sm:$0xf]
    %v101 = vld [vmem:[#allocation4 + $0x60] sm:$0xf]
    %v102 = vld [vmem:[#allocation4 + $0x64] sm:$0xf]
    %v103 = vld [vmem:[#allocation4 + $0x68] sm:$0xf]
    %v104 = vld [vmem:[#allocation4 + $0x6c] sm:$0xf]
    %v105 = vld [vmem:[#allocation4 + $0x70] sm:$0xf]
    %v106 = vld [vmem:[#allocation4 + $0x74] sm:$0xf]
    %v107 = vld [vmem:[#allocation4 + $0x78] sm:$0xf]
    %v108 = vld [vmem:[#allocation4 + $0x7c] sm:$0xf]
    %v109 = vld [vmem:[%s3] sm:$0x1]
    %v111 = vperm.slane %v109, 0
    %114 = vst [vmem:[#allocation1] ss:$9 sm:$0xff] %v76
    %v115 = vld [vmem:[#allocation1] sm:$0xff]
    %v116 = vld [vmem:[#allocation1 + $0x9] sm:$0xff]
    %v151 = vunpack.c.l.b16 %v77
    %v152 = vunpack.c.l.b16 %v78
    %v153 = vunpack.c.l.b16 %v79
    %v154 = vunpack.c.l.b16 %v80
    %v155 = vunpack.c.l.b16 %v81
    %v156 = vunpack.c.l.b16 %v82
    %v157 = vunpack.c.l.b16 %v83
    %v158 = vunpack.c.l.b16 %v84
    %v159 = vunpack.c.l.b16 %v85
    %v160 = vunpack.c.l.b16 %v86
    %v161 = vunpack.c.l.b16 %v87
    %v162 = vunpack.c.l.b16 %v88
    %v163 = vunpack.c.l.b16 %v89
    %v164 = vunpack.c.l.b16 %v90
    %v165 = vunpack.c.l.b16 %v91
    %v166 = vunpack.c.l.b16 %v92
    %v167 = vunpack.c.l.b16 %v93
    %v168 = vunpack.c.l.b16 %v94
    %v169 = vunpack.c.l.b16 %v95
    %v170 = vunpack.c.l.b16 %v96
    %v171 = vunpack.c.l.b16 %v97
    %v172 = vunpack.c.l.b16 %v98
    %v173 = vunpack.c.l.b16 %v99
    %v174 = vunpack.c.l.b16 %v100
    %v175 = vunpack.c.l.b16 %v101
    %v176 = vunpack.c.l.b16 %v102
    %v177 = vunpack.c.l.b16 %v103
    %v178 = vunpack.c.l.b16 %v104
    %v179 = vunpack.c.l.b16 %v105
    %v180 = vunpack.c.l.b16 %v106
    %v181 = vunpack.c.l.b16 %v107
    %v182 = vunpack.c.l.b16 %v108
    %v183 = vpack.c.b16 %v152, %v151
    %v184 = vpack.c.b16 %v154, %v153
    %v185 = vpack.c.b16 %v156, %v155
    %v186 = vpack.c.b16 %v158, %v157
    %v187 = vpack.c.b16 %v160, %v159
    %v188 = vpack.c.b16 %v162, %v161
    %v189 = vpack.c.b16 %v164, %v163
    %v190 = vpack.c.b16 %v166, %v165
    %v191 = vpack.c.b16 %v168, %v167
    %v192 = vpack.c.b16 %v170, %v169
    %v193 = vpack.c.b16 %v172, %v171
    %v194 = vpack.c.b16 %v174, %v173
    %v195 = vpack.c.b16 %v176, %v175
    %v196 = vpack.c.b16 %v178, %v177
    %v197 = vpack.c.b16 %v180, %v179
    %v198 = vpack.c.b16 %v182, %v181
    %215 = vmatpush.bf16.msra.mxu0 %v190
    %216 = vmatpush.bf16.msra.mxu0 %v189
    %217 = vmatpush.bf16.msra.mxu0 %v188
    %218 = vmatpush.bf16.msra.mxu0 %v187
    %219 = vmatpush.bf16.msra.mxu0 %v186
    %220 = vmatpush.bf16.msra.mxu0 %v185
    %221 = vmatpush.bf16.msra.mxu0 %v184
    %222 = vmatpush.bf16.msra.mxu0 %v183
    %223 = vmatmul.bf16.gmra.mxu0 %v115
    %v224 = vpop.f32.mrf.mxu0
    %v225 = vadd.f32 %v111, %v224
    %v226 = vpop.f32.mrf.mxu0
    %227 = vdwg.mxu0
    %228 = vmatpush.bf16.msra.mxu0 %v198
    %229 = vmatpush.bf16.msra.mxu0 %v197
    %230 = vmatpush.bf16.msra.mxu0 %v196
    %231 = vmatpush.bf16.msra.mxu0 %v195
    %232 = vmatpush.bf16.msra.mxu0 %v194
    %233 = vmatpush.bf16.msra.mxu0 %v193
    %234 = vmatpush.bf16.msra.mxu0 %v192
    %235 = vmatpush.bf16.msra.mxu0 %v191
    %236 = vmatmul.bf16.gmra.mxu0 %v116
    %v237 = vpop.f32.mrf.mxu0
    %v238 = vadd.f32 %v225, %v237
    %v239 = vpop.f32.mrf.mxu0
    %240 = vdwg.mxu0
    %v241 = vmax.f32 %v238, 0.0
    %s242 = sld [smem:[#allocation3]]
    %s243 = smul.u32 %s242, 668265263
    %s244 = sadd.s32 0, 1
    %s245 = smul.u32 %s244, 3266489909
    %s246 = sadd.s32 %s243, %s245
    %s247 = sadd.s32 %s246, 374761393
    %v248 = vlaneseq
    %v249 = vshrl.u32 %v248, 7
    %v250 = vlaneseq
    %v251 = vand.u32 %v250, 127
    %v252 = vmul.u32 %v249, 2654435769
    %v253 = vmul.u32 %v251, 2246822507
    %v254 = vadd.s32 %v252, %v253
    %v255 = vstv %s247
    %v256 = vadd.s32 %v254, %v255
    %v257 = vshrl.u32 %v256, 16
    %v258 = vxor.u32 %v256, %v257
    %v259 = vmul.u32 %v258, 2146121005
    %v260 = vshrl.u32 %v259, 15
    %v261 = vxor.u32 %v259, %v260
    %v262 = vmul.u32 %v261, 2221713035
    %v263 = vshrl.u32 %v262, 16
    %v264 = vxor.u32 %v262, %v263
    %v265 = vshrl.u32 %v264, 8
    %v266 = vadd.s32 %v265, 2147483648
    %vm268 = vcmp.ge.s32.totalorder %v266, 2150839091
    %v269 = vsel %vm268, 1.25, 0.0
    %v270 = vmul.f32 %v241, %v269
    %v271 = vpack.c.bf16 %v270, %v270
    %v272 = vld [vmem:[#allocation7] sm:$0xf]
    %v273 = vld [vmem:[#allocation7 + $0x4] sm:$0xf]
    %v274 = vld [vmem:[#allocation7 + $0x8] sm:$0xf]
    %v275 = vld [vmem:[#allocation7 + $0xc] sm:$0xf]
    %v276 = vld [vmem:[#allocation7 + $0x10] sm:$0xf]
    %v277 = vld [vmem:[#allocation7 + $0x14] sm:$0xf]
    %v278 = vld [vmem:[#allocation7 + $0x18] sm:$0xf]
    %v279 = vld [vmem:[#allocation7 + $0x1c] sm:$0xf]
    %v280 = vld [vmem:[#allocation7 + $0x20] sm:$0xf]
    %v281 = vld [vmem:[#allocation7 + $0x24] sm:$0xf]
    %v282 = vld [vmem:[#allocation7 + $0x28] sm:$0xf]
    %v283 = vld [vmem:[#allocation7 + $0x2c] sm:$0xf]
    %v284 = vld [vmem:[#allocation7 + $0x30] sm:$0xf]
    %v285 = vld [vmem:[#allocation7 + $0x34] sm:$0xf]
    %v286 = vld [vmem:[#allocation7 + $0x38] sm:$0xf]
    %v287 = vld [vmem:[#allocation7 + $0x3c] sm:$0xf]
    %v288 = vld [vmem:[%s5] sm:$0x1]
    %v290 = vperm.slane %v288, 0
    %v308 = vunpack.c.l.b16 %v272
    %v309 = vunpack.c.l.b16 %v273
    %v310 = vunpack.c.l.b16 %v274
    %v311 = vunpack.c.l.b16 %v275
    %v312 = vunpack.c.l.b16 %v276
    %v313 = vunpack.c.l.b16 %v277
    %v314 = vunpack.c.l.b16 %v278
    %v315 = vunpack.c.l.b16 %v279
    %v316 = vunpack.c.l.b16 %v280
    %v317 = vunpack.c.l.b16 %v281
    %v318 = vunpack.c.l.b16 %v282
    %v319 = vunpack.c.l.b16 %v283
    %v320 = vunpack.c.l.b16 %v284
    %v321 = vunpack.c.l.b16 %v285
    %v322 = vunpack.c.l.b16 %v286
    %v323 = vunpack.c.l.b16 %v287
    %v324 = vpack.c.b16 %v309, %v308
    %v325 = vpack.c.b16 %v311, %v310
    %v326 = vpack.c.b16 %v313, %v312
    %v327 = vpack.c.b16 %v315, %v314
    %v328 = vpack.c.b16 %v317, %v316
    %v329 = vpack.c.b16 %v319, %v318
    %v330 = vpack.c.b16 %v321, %v320
    %v331 = vpack.c.b16 %v323, %v322
    %340 = vmatpush.bf16.msra.mxu0 %v331
    %341 = vmatpush.bf16.msra.mxu0 %v330
    %342 = vmatpush.bf16.msra.mxu0 %v329
    %343 = vmatpush.bf16.msra.mxu0 %v328
    %344 = vmatpush.bf16.msra.mxu0 %v327
    %345 = vmatpush.bf16.msra.mxu0 %v326
    %346 = vmatpush.bf16.msra.mxu0 %v325
    %347 = vmatpush.bf16.msra.mxu0 %v324
    %348 = vmatmul.bf16.gmra.mxu0 %v271
    %v349 = vpop.f32.mrf.mxu0
    %v350 = vadd.f32 %v290, %v349
    %v351 = vpop.f32.mrf.mxu0
    %352 = vdwg.mxu0
    %v353 = vmax.f32 %v350, 0.0
    %s354 = sadd.s32 %s246, 749522786
    %v355 = vstv %s354
    %v356 = vadd.s32 %v254, %v355
    %v357 = vshrl.u32 %v356, 16
    %v358 = vxor.u32 %v356, %v357
    %v359 = vmul.u32 %v358, 2146121005
    %v360 = vshrl.u32 %v359, 15
    %v361 = vxor.u32 %v359, %v360
    %v362 = vmul.u32 %v361, 2221713035
    %v363 = vshrl.u32 %v362, 16
    %v364 = vxor.u32 %v362, %v363
    %v365 = vshrl.u32 %v364, 8
    %v366 = vadd.s32 %v365, 2147483648
    %vm368 = vcmp.ge.s32.totalorder %v366, 2155872256
    %v369 = vsel %vm368, 2.0, 0.0
    %v370 = vmul.f32 %v353, %v369
    %v371 = vpack.c.bf16 %v370, %v370
    %v372 = vld [vmem:[#allocation9] sm:$0xf]
    %v373 = vld [vmem:[#allocation9 + $0x4] sm:$0xf]
    %v374 = vld [vmem:[#allocation9 + $0x8] sm:$0xf]
    %v375 = vld [vmem:[#allocation9 + $0xc] sm:$0xf]
    %v376 = vld [vmem:[#allocation9 + $0x10] sm:$0xf]
    %v377 = vld [vmem:[#allocation9 + $0x14] sm:$0xf]
    %v378 = vld [vmem:[#allocation9 + $0x18] sm:$0xf]
    %v379 = vld [vmem:[#allocation9 + $0x1c] sm:$0xf]
    %v380 = vld [vmem:[#allocation9 + $0x20] sm:$0xf]
    %v381 = vld [vmem:[#allocation9 + $0x24] sm:$0xf]
    %v382 = vld [vmem:[#allocation9 + $0x28] sm:$0xf]
    %v383 = vld [vmem:[#allocation9 + $0x2c] sm:$0xf]
    %v384 = vld [vmem:[#allocation9 + $0x30] sm:$0xf]
    %v385 = vld [vmem:[#allocation9 + $0x34] sm:$0xf]
    %v386 = vld [vmem:[#allocation9 + $0x38] sm:$0xf]
    %v387 = vld [vmem:[#allocation9 + $0x3c] sm:$0xf]
    %v388 = vld [vmem:[%s7] sm:$0x1]
    %v390 = vperm.slane %v388, 0
    %v408 = vunpack.c.l.b16 %v372
    %v409 = vunpack.c.l.b16 %v373
    %v410 = vunpack.c.l.b16 %v374
    %v411 = vunpack.c.l.b16 %v375
    %v412 = vunpack.c.l.b16 %v376
    %v413 = vunpack.c.l.b16 %v377
    %v414 = vunpack.c.l.b16 %v378
    %v415 = vunpack.c.l.b16 %v379
    %v416 = vunpack.c.l.b16 %v380
    %v417 = vunpack.c.l.b16 %v381
    %v418 = vunpack.c.l.b16 %v382
    %v419 = vunpack.c.l.b16 %v383
    %v420 = vunpack.c.l.b16 %v384
    %v421 = vunpack.c.l.b16 %v385
    %v422 = vunpack.c.l.b16 %v386
    %v423 = vunpack.c.l.b16 %v387
    %v424 = vpack.c.b16 %v409, %v408
    %v425 = vpack.c.b16 %v411, %v410
    %v426 = vpack.c.b16 %v413, %v412
    %v427 = vpack.c.b16 %v415, %v414
    %v428 = vpack.c.b16 %v417, %v416
    %v429 = vpack.c.b16 %v419, %v418
    %v430 = vpack.c.b16 %v421, %v420
    %v431 = vpack.c.b16 %v423, %v422
    %440 = vmatpush.bf16.msra.mxu0 %v431
    %441 = vmatpush.bf16.msra.mxu0 %v430
    %442 = vmatpush.bf16.msra.mxu0 %v429
    %443 = vmatpush.bf16.msra.mxu0 %v428
    %444 = vmatpush.bf16.msra.mxu0 %v427
    %445 = vmatpush.bf16.msra.mxu0 %v426
    %446 = vmatpush.bf16.msra.mxu0 %v425
    %447 = vmatpush.bf16.msra.mxu0 %v424
    %448 = vmatmul.bf16.gmra.mxu0 %v371
    %v449 = vpop.f32.mrf.mxu0
    %v450 = vadd.f32 %v390, %v449
    %v451 = vpop.f32.mrf.mxu0
    %452 = vdwg.mxu0
    %453 = vst [vmem:[#allocation10] sm:$0x3] %v450
    // Predicated region
    $region42: #{tpu_custom_call.1} parent=1 // pred_check
      _
    $region43: #{tpu_custom_call.1} parent=1 // pred_check_branch
      %455 = sbr.rel (0) target = $region45
    $region44: #{tpu_custom_call.1} parent=1 // pred_region
      %457 = vsyncadd [#allocation6], 0
      %s459 = sshll.u32 [#allocation10], 4
      %s460 = int_to_ptr.vmem [resolvable:$true] %s459
      %s461 = sshll.u32 %s8, 4
      %s462 = int_to_ptr.hbm [resolvable:$true] %s461
      %464 = dma.vmem_to_hbm [thread:$0]  %s460, 32, %s462, [#allocation6]
    $region45: #{tpu_custom_call.1} parent=1 // pred_fallthru
      _
    // Predicated region
    $region46: #{tpu_custom_call.1} parent=1 // pred_check
      _
    $region47: #{tpu_custom_call.1} parent=1 // pred_check_branch
      %466 = sbr.rel (0) target = $region49
    $region48: #{tpu_custom_call.1} parent=1 // pred_region
      %468 = dma.done [#allocation6], 32
    $region49: #{tpu_custom_call.1} parent=1 // pred_fallthru
      _
    %469 = vsyncpa [#allocation5], 1
    %470 = vsyncpa [#allocation8], 1
    %471 = vsyncpa [#allocation6], 1

</llo_original>
